<compile_context>
chip_gen: v5e
topology: v5e:2x2
jax: 0.10.0
libtpu: 0.0.40
codegen_flags: <defaults>
</compile_context>

<pallas_src>
import functools
import math

import jax
import jax.numpy as jnp
from jax.experimental import pallas as pl
from jax.experimental.pallas import tpu as pltpu

# FocalLoss.__init__ defaults (no learned weights).
ALPHA = 0.25
BETA = 2.0
EPS = 1e-5


def _round_up(x, m):
    return ((x + m - 1) // m) * m


def _focal_loss_kernel(x_ref, t_ref, o_ref, *, alpha, beta, eps, total, masked):
    # Cast to f32 inside the kernel (inputs may be bf16; v5e has no bf16 VPU/EUP).
    x = x_ref[...].astype(jnp.float32)
    t = t_ref[...].astype(jnp.float32)

    x = jnp.clip(x, jnp.float32(eps), jnp.float32(1.0 - eps))
    log_x = jnp.log(x)          # EUP
    log_1mx = jnp.log1p(-x)     # EUP

    loss_1 = (1.0 - x) * log_x

    one_minus_t = 1.0 - t
    if beta == 2.0:
        # Avoid jnp.power's exp/log + select lowering for the default beta.
        pow_1mt = one_minus_t * one_minus_t
    else:
        pow_1mt = jnp.power(one_minus_t, jnp.float32(beta))
    # x is clamped to (eps, 1-eps) > 0, so exp(alpha*log(x)) == x**alpha exactly,
    # and it reuses log_x (1 EUP op instead of ~4 from jnp.power).
    pow_x = jnp.exp(jnp.float32(alpha) * log_x)   # EUP
    loss_2 = pow_1mt * pow_x * log_1mx

    loss = jnp.where(t == 1.0, loss_1, loss_2)

    if masked:
        # Only emitted when the flattened input was padded; zero the padding
        # so the sum (and therefore the mean) is exact.
        rows, cols = loss.shape
        full_rows = total // cols          # static python ints
        rem = total % cols
        row_g = pl.program_id(0) * rows + jax.lax.broadcasted_iota(
            jnp.int32, loss.shape, 0)
        col = jax.lax.broadcasted_iota(jnp.int32, loss.shape, 1)
        valid = (row_g < full_rows) | ((row_g == full_rows) & (col < rem))
        loss = jnp.where(valid, loss, jnp.float32(0.0))

    # One f32 partial sum per grid step, broadcast into an (8,128)-aligned block.
    o_ref[...] = jnp.full(o_ref.shape, jnp.sum(loss), jnp.float32)


def focal_loss(inputs, targets, *, alpha=ALPHA, beta=BETA, eps=EPS,
               block_rows=512, lanes=1024):
    """inputs, targets: [B, C, H, W] arrays (any float dtype). Returns scalar f32."""
    total = int(math.prod(inputs.shape))
    lane = lanes if total >= lanes else 128
    m_raw = max(1, pl.cdiv(total, lane))
    bm = min(block_rows, _round_up(m_raw, 8))   # small inputs -> small block
    m = _round_up(m_raw, bm)
    pad = m * lane - total
    grid = m // bm

    x = inputs.reshape(-1)
    t = targets.reshape(-1)
    if pad:
        x = jnp.pad(x, (0, pad))
        t = jnp.pad(t, (0, pad))
    x = x.reshape(m, lane)
    t = t.reshape(m, lane)

    kernel = functools.partial(
        _focal_loss_kernel, alpha=alpha, beta=beta, eps=eps,
        total=total, masked=(pad > 0))

    partial_sums = pl.pallas_call(
        kernel,
        out_shape=jax.ShapeDtypeStruct((grid, 8, 128), jnp.float32),
        grid_spec=pltpu.PrefetchScalarGridSpec(
            num_scalar_prefetch=0,
            grid=(grid,),
            in_specs=[
                pl.BlockSpec((bm, lane), lambda j: (j, 0)),
                pl.BlockSpec((bm, lane), lambda j: (j, 0)),
            ],
            out_specs=pl.BlockSpec((1, 8, 128), lambda j: (j, 0, 0)),
        ),
        compiler_params=pltpu.CompilerParams(
            dimension_semantics=("parallel",),
            vmem_limit_bytes=32 * 1024 * 1024,
        ),
    )(x, t)

    # Tiny final reduction + mean + negation outside the kernel.
    return -(jnp.sum(partial_sums[:, 0, 0]) / jnp.float32(total))


def focal_loss_ref(inputs, targets, *, alpha=ALPHA, beta=BETA, eps=EPS):
    B = inputs.shape[0]
    x = inputs.reshape(B, -1).astype(jnp.float32)
    t = targets.reshape(B, -1).astype(jnp.float32)
    x = jnp.clip(x, eps, 1.0 - eps)
    loss_1 = (1.0 - x) * jnp.log(x)
    loss_2 = jnp.power(1.0 - t, beta) * jnp.power(x, alpha) * jnp.log1p(-x)
    loss = jnp.where(t == 1.0, loss_1, loss_2)
    return -jnp.mean(loss)


if __name__ == "__main__":
    key = jax.random.PRNGKey(0)
    k1, k2, k3, k4 = jax.random.split(key, 4)

    # Primary shape from the module spec.
    B, C, H, W = 2, 4, 16, 16
    inputs = jax.nn.sigmoid(jax.random.normal(k1, (B, C, H, W), jnp.float32))
    targets = (jax.random.uniform(k2, (B, C, H, W)) > 0.5).astype(jnp.float32)

    out = focal_loss(inputs, targets)
    jax.block_until_ready(out)
    ref = focal_loss_ref(inputs, targets)
    assert jnp.allclose(out, ref, rtol=1e-5, atol=1e-6), (out, ref)

    # Unaligned total + soft (non-binary) targets: exercises the padding mask
    # and the (1-t)^beta path.
    shp = (2, 3, 15, 17)
    inputs2 = jax.nn.sigmoid(jax.random.normal(k3, shp, jnp.float32))
    targets2 = jax.random.uniform(k4, shp, jnp.float32)
    out2 = focal_loss(inputs2, targets2)
    jax.block_until_ready(out2)
    ref2 = focal_loss_ref(inputs2, targets2)
    assert jnp.allclose(out2, ref2, rtol=1e-5, atol=1e-6), (out2, ref2)

    print("KERNEL_OK")
</pallas_src>

<mosaic_0001>
module attributes {stable_mosaic.version = 11 : i64} {
  func.func @_focal_loss_kernel(%arg0: i32, %arg1: memref<8x1024xf32, #tpu.memory_space<vmem>>, %arg2: memref<8x1024xf32, #tpu.memory_space<vmem>>, %arg3: memref<1x8x128xf32, #tpu.memory_space<vmem>>) attributes {dimension_semantics = [#tpu.dimension_semantics<parallel>], iteration_bounds = array<i64: 1>, scalar_prefetch = 0 : i64, scratch_operands = 0 : i64, tpu.core_type = #tpu.core_type<tc>, window_params = [{transform_indices = @transform_0, window_bounds = array<i64: 8, 1024>}, {transform_indices = @transform_1, window_bounds = array<i64: 8, 1024>}, {transform_indices = @transform_2, window_bounds = array<i64: 1, 8, 128>}]} {
    %c0 = arith.constant 0 : index
    %c0_0 = arith.constant 0 : index
    %0 = vector.load %arg1[%c0, %c0_0] : memref<8x1024xf32, #tpu.memory_space<vmem>>, vector<8x1024xf32>
    %c0_1 = arith.constant 0 : index
    %c0_2 = arith.constant 0 : index
    %1 = vector.load %arg2[%c0_1, %c0_2] : memref<8x1024xf32, #tpu.memory_space<vmem>>, vector<8x1024xf32>
    %cst = arith.constant 9.99999974E-6 : f32
    %cst_3 = arith.constant 0.999989986 : f32
    %2 = vector.broadcast %cst : f32 to vector<8x1024xf32>
    %3 = arith.maximumf %2, %0 : vector<8x1024xf32>
    %4 = vector.broadcast %cst_3 : f32 to vector<8x1024xf32>
    %5 = arith.minimumf %4, %3 : vector<8x1024xf32>
    %6 = math.log %5 : vector<8x1024xf32>
    %cst_4 = arith.constant 0.000000e+00 : f32
    %7 = vector.broadcast %cst_4 : f32 to vector<8x1024xf32>
    %8 = arith.subf %7, %5 : vector<8x1024xf32>
    %9 = math.log1p %8 : vector<8x1024xf32>
    %cst_5 = arith.constant 1.000000e+00 : f32
    %10 = vector.broadcast %cst_5 : f32 to vector<8x1024xf32>
    %11 = arith.subf %10, %5 : vector<8x1024xf32>
    %12 = arith.mulf %11, %6 : vector<8x1024xf32>
    %cst_6 = arith.constant 1.000000e+00 : f32
    %13 = vector.broadcast %cst_6 : f32 to vector<8x1024xf32>
    %14 = arith.subf %13, %1 : vector<8x1024xf32>
    %15 = arith.mulf %14, %14 : vector<8x1024xf32>
    %cst_7 = arith.constant 2.500000e-01 : f32
    %16 = vector.broadcast %cst_7 : f32 to vector<8x1024xf32>
    %17 = arith.mulf %16, %6 : vector<8x1024xf32>
    %18 = math.exp %17 : vector<8x1024xf32>
    %19 = arith.mulf %15, %18 : vector<8x1024xf32>
    %20 = arith.mulf %19, %9 : vector<8x1024xf32>
    %cst_8 = arith.constant 1.000000e+00 : f32
    %21 = vector.broadcast %cst_8 : f32 to vector<8x1024xf32>
    %22 = arith.cmpf oeq, %1, %21 : vector<8x1024xf32>
    %23 = arith.select %22, %12, %20 : vector<8x1024xi1>, vector<8x1024xf32>
    %c8_i32 = arith.constant 8 : i32
    %24 = arith.muli %arg0, %c8_i32 : i32
    %25 = tpu.iota {dimensions = array<i32: 0>} : vector<8x1024xi32>
    %26 = vector.broadcast %24 : i32 to vector<8x1024xi32>
    %27 = arith.addi %26, %25 : vector<8x1024xi32>
    %28 = tpu.iota {dimensions = array<i32: 1>} : vector<8x1024xi32>
    %c2_i32 = arith.constant 2 : i32
    %29 = vector.broadcast %c2_i32 : i32 to vector<8x1024xi32>
    %30 = arith.cmpi slt, %27, %29 : vector<8x1024xi32>
    %c2_i32_9 = arith.constant 2 : i32
    %31 = vector.broadcast %c2_i32_9 : i32 to vector<8x1024xi32>
    %32 = arith.cmpi eq, %27, %31 : vector<8x1024xi32>
    %c0_i32 = arith.constant 0 : i32
    %33 = vector.broadcast %c0_i32 : i32 to vector<8x1024xi32>
    %34 = arith.cmpi slt, %28, %33 : vector<8x1024xi32>
    %35 = arith.andi %32, %34 : vector<8x1024xi1>
    %36 = arith.ori %30, %35 : vector<8x1024xi1>
    %cst_10 = arith.constant 0.000000e+00 : f32
    %37 = vector.broadcast %cst_10 : f32 to vector<8x1024xf32>
    %38 = arith.select %36, %23, %37 : vector<8x1024xi1>, vector<8x1024xf32>
    %39 = vector.shape_cast %38 : vector<8x1024xf32> to vector<1x8x1024xf32>
    %cst_11 = arith.constant dense<0.000000e+00> : vector<1xf32>
    %40 = vector.multi_reduction <add>, %39, %cst_11 [1, 2] : vector<1x8x1024xf32> to vector<1xf32>
    %41 = vector.shape_cast %40 : vector<1xf32> to vector<1x1x1xf32>
    %42 = vector.extract %41[0, 0, 0] : f32 from vector<1x1x1xf32>
    %43 = vector.broadcast %42 : f32 to vector<1x8x128xf32>
    %c0_12 = arith.constant 0 : index
    %c0_13 = arith.constant 0 : index
    %c0_14 = arith.constant 0 : index
    %44 = vector.load %arg3[%c0_12, %c0_13, %c0_14] : memref<1x8x128xf32, #tpu.memory_space<vmem>>, vector<1x8x128xf32>
    tpu.vector_store %arg3[%c0_12, %c0_13, %c0_14], %43 {strides = array<i32>} : memref<1x8x128xf32, #tpu.memory_space<vmem>>, vector<1x8x128xf32>,
    return
  }
  func.func @transform_0(%arg0: i32) -> (i32, i32) {
    %c0_i32 = arith.constant 0 : i32
    %c0_i32_0 = arith.constant 0 : i32
    return %arg0, %c0_i32 : i32, i32
  }
  func.func @transform_1(%arg0: i32) -> (i32, i32) {
    %c0_i32 = arith.constant 0 : i32
    %c0_i32_0 = arith.constant 0 : i32
    return %arg0, %c0_i32 : i32, i32
  }
  func.func @transform_2(%arg0: i32) -> (i32, i32, i32) {
    %c0_i32 = arith.constant 0 : i32
    %c0_i32_0 = arith.constant 0 : i32
    %c0_i32_1 = arith.constant 0 : i32
    return %arg0, %c0_i32, %c0_i32_0 : i32, i32, i32
  }
}

</mosaic_0001>

<llo_original>
// kernel: tpu_custom_call.1
$region0: #{tpu_custom_call.1}
  #allocation0 [shape = 'u32[]', space=smem, size = 0x4, offset = 0x4, fixed_abs, tag = 'smem constant byte address 0x4 - core index']
  #allocation1 [shape = 'u32[72,128]{1,0:T(1,128)}', space=vmem, size = 0x9000, scoped, tag = 'internal scratch']
  %s0 = inlined_call_operand.hbm [shape: f32[8,1024], index: 0, kind: input, shape index: {}]
  %s1 = inlined_call_operand.hbm [shape: f32[8,1024], index: 1, kind: input, shape index: {}]
  %s2 = inlined_call_operand.hbm [shape: f32[1,8,128], index: 2, kind: output, shape index: {}]
  %s3 = sld [smem:[#allocation0]]
  $region26: #{tpu_custom_call.1} parent=0
    _
  %s5 = ssub.s32 1, %s3
  %s6 = scalar_select 0, %s5, %s3
  $region1: #{tpu_custom_call.1} parent=0
    #allocation2 [shape = 'u8[32768]{0}', space=vmem, size = 0x8000, scoped, tag = 'input window, operand 0, single buffered']
    #allocation3 [shape = 's32[1]{0}', space=sflag, size = 0x4, scoped, tag = 'scoped memory for tpu_custom_call.1']
    #allocation4 [shape = 's32[1]{0}', space=sflag, size = 0x4, scoped, tag = 'scoped memory for tpu_custom_call.1']
    #allocation5 [shape = 'u8[32768]{0}', space=vmem, size = 0x8000, scoped, tag = 'input window, operand 1, single buffered']
    #allocation6 [shape = 's32[1]{0}', space=sflag, size = 0x4, scoped, tag = 'scoped memory for tpu_custom_call.1']
    #allocation7 [shape = 'u8[4096]{0}', space=vmem, size = 0x1000, scoped, tag = 'output window, operand 0, single buffered']
    %7 = vsyncpa [#allocation3], 0
    %8 = vsyncpa [#allocation6], 0
    %9 = vsyncpa [#allocation4], 0
    // Predicated region
    $region2: #{tpu_custom_call.1} parent=1 // pred_check
      _
    $region3: #{tpu_custom_call.1} parent=1 // pred_check_branch
      %11 = sbr.rel (0) target = $region5
    $region4: #{tpu_custom_call.1} parent=1 // pred_region
      %13 = vsyncadd [#allocation3], 0
      %s15 = sshll.u32 %s0, 4
      %s16 = int_to_ptr.hbm [resolvable:$true] %s15
      %s17 = sshll.u32 [#allocation2], 4
      %s18 = int_to_ptr.vmem [resolvable:$true] %s17
      %20 = dma.hbm_to_vmem [thread:$0]  %s16, 1024, %s18, [#allocation3]
    $region5: #{tpu_custom_call.1} parent=1 // pred_fallthru
      _
    // Predicated region
    $region6: #{tpu_custom_call.1} parent=1 // pred_check
      _
    $region7: #{tpu_custom_call.1} parent=1 // pred_check_branch
      %22 = sbr.rel (0) target = $region9
    $region8: #{tpu_custom_call.1} parent=1 // pred_region
      %24 = vsyncadd [#allocation6], 0
      %s26 = sshll.u32 %s1, 4
      %s27 = int_to_ptr.hbm [resolvable:$true] %s26
      %s28 = sshll.u32 [#allocation5], 4
      %s29 = int_to_ptr.vmem [resolvable:$true] %s28
      %31 = dma.hbm_to_vmem [thread:$0]  %s27, 1024, %s29, [#allocation6]
    $region9: #{tpu_custom_call.1} parent=1 // pred_fallthru
      _
    // Predicated region
    $region10: #{tpu_custom_call.1} parent=1 // pred_check
      _
    $region11: #{tpu_custom_call.1} parent=1 // pred_check_branch
      %33 = sbr.rel (0) target = $region13
    $region12: #{tpu_custom_call.1} parent=1 // pred_region
      %35 = dma.done [#allocation3], 1024
    $region13: #{tpu_custom_call.1} parent=1 // pred_fallthru
      _
    // Predicated region
    $region14: #{tpu_custom_call.1} parent=1 // pred_check
      _
    $region15: #{tpu_custom_call.1} parent=1 // pred_check_branch
      %37 = sbr.rel (0) target = $region17
    $region16: #{tpu_custom_call.1} parent=1 // pred_region
      %39 = dma.done [#allocation6], 1024
    $region17: #{tpu_custom_call.1} parent=1 // pred_fallthru
      _
    %v40 = vld [vmem:[#allocation2] sm:$0xff]
    %v41 = vld [vmem:[#allocation2 + $0x8] sm:$0xff]
    %v42 = vld [vmem:[#allocation2 + $0x10] sm:$0xff]
    %v43 = vld [vmem:[#allocation2 + $0x18] sm:$0xff]
    %v44 = vld [vmem:[#allocation2 + $0x20] sm:$0xff]
    %v45 = vld [vmem:[#allocation2 + $0x28] sm:$0xff]
    %v46 = vld [vmem:[#allocation2 + $0x30] sm:$0xff]
    %v47 = vld [vmem:[#allocation2 + $0x38] sm:$0xff]
    %v48 = vld [vmem:[#allocation5] sm:$0xff]
    %v49 = vld [vmem:[#allocation5 + $0x8] sm:$0xff]
    %v50 = vld [vmem:[#allocation5 + $0x10] sm:$0xff]
    %v51 = vld [vmem:[#allocation5 + $0x18] sm:$0xff]
    %v52 = vld [vmem:[#allocation5 + $0x20] sm:$0xff]
    %v53 = vld [vmem:[#allocation5 + $0x28] sm:$0xff]
    %v54 = vld [vmem:[#allocation5 + $0x30] sm:$0xff]
    %v55 = vld [vmem:[#allocation5 + $0x38] sm:$0xff]
    %v56 = vmax.f32 %v40, 1e-05
    %v57 = vmax.f32 %v41, 1e-05
    %v58 = vmax.f32 %v42, 1e-05
    %v59 = vmax.f32 %v43, 1e-05
    %v60 = vmax.f32 %v44, 1e-05
    %v61 = vmax.f32 %v45, 1e-05
    %v62 = vmax.f32 %v46, 1e-05
    %v63 = vmax.f32 %v47, 1e-05
    %v64 = vmin.f32 %v56, 0.99999
    %v65 = vmin.f32 %v57, 0.99999
    %v66 = vmin.f32 %v58, 0.99999
    %v67 = vmin.f32 %v59, 0.99999
    %v68 = vmin.f32 %v60, 0.99999
    %v69 = vmin.f32 %v61, 0.99999
    %v70 = vmin.f32 %v62, 0.99999
    %v71 = vmin.f32 %v63, 0.99999
    %v72 = vlog2.pop %v64
    %v73 = vmul.f32 %v72, 0.6931472
    %v74 = vlog2.pop %v65
    %v75 = vmul.f32 %v74, 0.6931472
    %v76 = vlog2.pop %v66
    %v77 = vmul.f32 %v76, 0.6931472
    %v78 = vlog2.pop %v67
    %v79 = vmul.f32 %v78, 0.6931472
    %v80 = vlog2.pop %v68
    %v81 = vmul.f32 %v80, 0.6931472
    %v82 = vlog2.pop %v69
    %v83 = vmul.f32 %v82, 0.6931472
    %v84 = vlog2.pop %v70
    %v85 = vmul.f32 %v84, 0.6931472
    %v86 = vlog2.pop %v71
    %v87 = vmul.f32 %v86, 0.6931472
    %v88 = vsub.f32 0.0, %v64
    %v89 = vsub.f32 0.0, %v65
    %v90 = vsub.f32 0.0, %v66
    %v91 = vsub.f32 0.0, %v67
    %v92 = vsub.f32 0.0, %v68
    %v93 = vsub.f32 0.0, %v69
    %v94 = vsub.f32 0.0, %v70
    %v95 = vsub.f32 0.0, %v71
    %v96 = vadd.f32 %v88, 1.0
    %v97 = vlog2.pop %v96
    %v98 = vmul.f32 %v97, 0.6931472
    %v99 = vmul.f32 -0.5, %v88
    %v100 = vadd.f32 %v99, 1.0
    %v101 = vmul.f32 %v100, %v88
    %v102 = vand.u32 2147483647, %v88
    %vm103 = vcmp.lt.f32.partialorder %v102, 0.0004427343
    %v104 = vsel %vm103, %v101, %v98
    %v105 = vadd.f32 %v89, 1.0
    %v106 = vlog2.pop %v105
    %v107 = vmul.f32 %v106, 0.6931472
    %v108 = vmul.f32 -0.5, %v89
    %v109 = vadd.f32 %v108, 1.0
    %v110 = vmul.f32 %v109, %v89
    %v111 = vand.u32 2147483647, %v89
    %vm112 = vcmp.lt.f32.partialorder %v111, 0.0004427343
    %v113 = vsel %vm112, %v110, %v107
    %v114 = vadd.f32 %v90, 1.0
    %v115 = vlog2.pop %v114
    %v116 = vmul.f32 %v115, 0.6931472
    %v117 = vmul.f32 -0.5, %v90
    %v118 = vadd.f32 %v117, 1.0
    %v119 = vmul.f32 %v118, %v90
    %v120 = vand.u32 2147483647, %v90
    %vm121 = vcmp.lt.f32.partialorder %v120, 0.0004427343
    %v122 = vsel %vm121, %v119, %v116
    %v123 = vadd.f32 %v91, 1.0
    %v124 = vlog2.pop %v123
    %v125 = vmul.f32 %v124, 0.6931472
    %v126 = vmul.f32 -0.5, %v91
    %v127 = vadd.f32 %v126, 1.0
    %v128 = vmul.f32 %v127, %v91
    %v129 = vand.u32 2147483647, %v91
    %vm130 = vcmp.lt.f32.partialorder %v129, 0.0004427343
    %v131 = vsel %vm130, %v128, %v125
    %v132 = vadd.f32 %v92, 1.0
    %v133 = vlog2.pop %v132
    %v134 = vmul.f32 %v133, 0.6931472
    %v135 = vmul.f32 -0.5, %v92
    %v136 = vadd.f32 %v135, 1.0
    %v137 = vmul.f32 %v136, %v92
    %v138 = vand.u32 2147483647, %v92
    %vm139 = vcmp.lt.f32.partialorder %v138, 0.0004427343
    %v140 = vsel %vm139, %v137, %v134
    %v141 = vadd.f32 %v93, 1.0
    %v142 = vlog2.pop %v141
    %v143 = vmul.f32 %v142, 0.6931472
    %v144 = vmul.f32 -0.5, %v93
    %v145 = vadd.f32 %v144, 1.0
    %v146 = vmul.f32 %v145, %v93
    %v147 = vand.u32 2147483647, %v93
    %vm148 = vcmp.lt.f32.partialorder %v147, 0.0004427343
    %v149 = vsel %vm148, %v146, %v143
    %v150 = vadd.f32 %v94, 1.0
    %v151 = vlog2.pop %v150
    %v152 = vmul.f32 %v151, 0.6931472
    %v153 = vmul.f32 -0.5, %v94
    %v154 = vadd.f32 %v153, 1.0
    %v155 = vmul.f32 %v154, %v94
    %v156 = vand.u32 2147483647, %v94
    %vm157 = vcmp.lt.f32.partialorder %v156, 0.0004427343
    %v158 = vsel %vm157, %v155, %v152
    %v159 = vadd.f32 %v95, 1.0
    %v160 = vlog2.pop %v159
    %v161 = vmul.f32 %v160, 0.6931472
    %v162 = vmul.f32 -0.5, %v95
    %v163 = vadd.f32 %v162, 1.0
    %v164 = vmul.f32 %v163, %v95
    %v165 = vand.u32 2147483647, %v95
    %vm166 = vcmp.lt.f32.partialorder %v165, 0.0004427343
    %v167 = vsel %vm166, %v164, %v161
    %v168 = vsub.f32 1.0, %v64
    %v169 = vsub.f32 1.0, %v65
    %v170 = vsub.f32 1.0, %v66
    %v171 = vsub.f32 1.0, %v67
    %v172 = vsub.f32 1.0, %v68
    %v173 = vsub.f32 1.0, %v69
    %v174 = vsub.f32 1.0, %v70
    %v175 = vsub.f32 1.0, %v71
    %v176 = vmul.f32 %v168, %v73
    %v177 = vmul.f32 %v169, %v75
    %v178 = vmul.f32 %v170, %v77
    %v179 = vmul.f32 %v171, %v79
    %v180 = vmul.f32 %v172, %v81
    %v181 = vmul.f32 %v173, %v83
    %v182 = vmul.f32 %v174, %v85
    %v183 = vmul.f32 %v175, %v87
    %v184 = vsub.f32 1.0, %v48
    %v185 = vsub.f32 1.0, %v49
    %v186 = vsub.f32 1.0, %v50
    %v187 = vsub.f32 1.0, %v51
    %v188 = vsub.f32 1.0, %v52
    %v189 = vsub.f32 1.0, %v53
    %v190 = vsub.f32 1.0, %v54
    %v191 = vsub.f32 1.0, %v55
    %v192 = vmul.f32 %v184, %v184
    %v193 = vmul.f32 %v185, %v185
    %v194 = vmul.f32 %v186, %v186
    %v195 = vmul.f32 %v187, %v187
    %v196 = vmul.f32 %v188, %v188
    %v197 = vmul.f32 %v189, %v189
    %v198 = vmul.f32 %v190, %v190
    %v199 = vmul.f32 %v191, %v191
    %v200 = vmul.f32 %v73, 0.25
    %v201 = vmul.f32 %v75, 0.25
    %v202 = vmul.f32 %v77, 0.25
    %v203 = vmul.f32 %v79, 0.25
    %v204 = vmul.f32 %v81, 0.25
    %v205 = vmul.f32 %v83, 0.25
    %v206 = vmul.f32 %v85, 0.25
    %v207 = vmul.f32 %v87, 0.25
    %v208 = vmul.f32 %v200, 1.442695
    %v209 = vpow.pop %v208
    %v210 = vmul.f32 %v201, 1.442695
    %v211 = vpow.pop %v210
    %v212 = vmul.f32 %v202, 1.442695
    %v213 = vpow.pop %v212
    %v214 = vmul.f32 %v203, 1.442695
    %v215 = vpow.pop %v214
    %v216 = vmul.f32 %v204, 1.442695
    %v217 = vpow.pop %v216
    %v218 = vmul.f32 %v205, 1.442695
    %v219 = vpow.pop %v218
    %v220 = vmul.f32 %v206, 1.442695
    %v221 = vpow.pop %v220
    %v222 = vmul.f32 %v207, 1.442695
    %v223 = vpow.pop %v222
    %v224 = vmul.f32 %v192, %v209
    %v225 = vmul.f32 %v193, %v211
    %v226 = vmul.f32 %v194, %v213
    %v227 = vmul.f32 %v195, %v215
    %v228 = vmul.f32 %v196, %v217
    %v229 = vmul.f32 %v197, %v219
    %v230 = vmul.f32 %v198, %v221
    %v231 = vmul.f32 %v199, %v223
    %v232 = vmul.f32 %v224, %v104
    %v233 = vmul.f32 %v225, %v113
    %v234 = vmul.f32 %v226, %v122
    %v235 = vmul.f32 %v227, %v131
    %v236 = vmul.f32 %v228, %v140
    %v237 = vmul.f32 %v229, %v149
    %v238 = vmul.f32 %v230, %v158
    %v239 = vmul.f32 %v231, %v167
    %vm240 = vcmp.eq.f32.partialorder %v48, 1.0
    %vm241 = vcmp.eq.f32.partialorder %v49, 1.0
    %vm242 = vcmp.eq.f32.partialorder %v50, 1.0
    %vm243 = vcmp.eq.f32.partialorder %v51, 1.0
    %vm244 = vcmp.eq.f32.partialorder %v52, 1.0
    %vm245 = vcmp.eq.f32.partialorder %v53, 1.0
    %vm246 = vcmp.eq.f32.partialorder %v54, 1.0
    %vm247 = vcmp.eq.f32.partialorder %v55, 1.0
    %v248 = vsel %vm240, %v176, %v232
    %v249 = vsel %vm241, %v177, %v233
    %v250 = vsel %vm242, %v178, %v234
    %v251 = vsel %vm243, %v179, %v235
    %v252 = vsel %vm244, %v180, %v236
    %v253 = vsel %vm245, %v181, %v237
    %v254 = vsel %vm246, %v182, %v238
    %v255 = vsel %vm247, %v183, %v239
    %s256 = smul.u32 0, 8
    %v257 = vlaneseq
    %v258 = vshrl.u32 %v257, 7
    %v259 = vstv %s256
    %v260 = vadd.s32 %v259, %v258
    %v261 = vlaneseq
    %v262 = vand.u32 %v261, 127
    %v263 = vadd.s32 %v262, 128
    %v264 = vadd.s32 %v262, 256
    %v265 = vadd.s32 %v262, 384
    %v266 = vadd.s32 %v262, 512
    %v267 = vadd.s32 %v262, 640
    %v268 = vadd.s32 %v262, 768
    %v269 = vadd.s32 %v262, 896
    %vm270 = vcmp.lt.s32.totalorder %v260, 2
    %vm271 = vcmp.eq.s32.totalorder %v260, 2
    %vm272 = vcmp.lt.s32.totalorder %v262, 0
    %vm273 = vcmp.lt.s32.totalorder %v263, 0
    %vm274 = vcmp.lt.s32.totalorder %v264, 0
    %vm275 = vcmp.lt.s32.totalorder %v265, 0
    %vm276 = vcmp.lt.s32.totalorder %v266, 0
    %vm277 = vcmp.lt.s32.totalorder %v267, 0
    %vm278 = vcmp.lt.s32.totalorder %v268, 0
    %vm279 = vcmp.lt.s32.totalorder %v269, 0
    %vm280 = vmand %vm271, %vm272
    %vm281 = vmand %vm271, %vm273
    %vm282 = vmand %vm271, %vm274
    %vm283 = vmand %vm271, %vm275
    %vm284 = vmand %vm271, %vm276
    %vm285 = vmand %vm271, %vm277
    %vm286 = vmand %vm271, %vm278
    %vm287 = vmand %vm271, %vm279
    %vm288 = vmor %vm270, %vm280
    %vm289 = vmor %vm270, %vm281
    %vm290 = vmor %vm270, %vm282
    %vm291 = vmor %vm270, %vm283
    %vm292 = vmor %vm270, %vm284
    %vm293 = vmor %vm270, %vm285
    %vm294 = vmor %vm270, %vm286
    %vm295 = vmor %vm270, %vm287
    %v296 = vsel %vm288, %v248, 0.0
    %v297 = vsel %vm289, %v249, 0.0
    %v298 = vsel %vm290, %v250, 0.0
    %v299 = vsel %vm291, %v251, 0.0
    %v300 = vsel %vm292, %v252, 0.0
    %v301 = vsel %vm293, %v253, 0.0
    %v302 = vsel %vm294, %v254, 0.0
    %v303 = vsel %vm295, %v255, 0.0
    %v304 = vadd.f32 %v296, %v297
    %v305 = vadd.f32 %v304, %v298
    %v306 = vadd.f32 %v305, %v299
    %v307 = vadd.f32 %v306, %v300
    %v308 = vadd.f32 %v307, %v301
    %v309 = vadd.f32 %v308, %v302
    %v310 = vadd.f32 %v309, %v303
    %311 = vadd.xlane.f32.xlu0 %v310
    %v312 = vpop.xlane.xlu0 %311
    %v313 = vrot.slane %v312, 4
    %v314 = vadd.f32 %v312, %v313
    %v315 = vrot.slane %v314, 2
    %v316 = vadd.f32 %v314, %v315
    %v317 = vrot.slane %v316, 1
    %v318 = vadd.f32 %v316, %v317
    %s319 = vtos %v318
    %v320 = vstv %s319
    %321 = vst [vmem:[#allocation7] sm:$0xff] %v320
    // Predicated region
    $region18: #{tpu_custom_call.1} parent=1 // pred_check
      _
    $region19: #{tpu_custom_call.1} parent=1 // pred_check_branch
      %323 = sbr.rel (0) target = $region21
    $region20: #{tpu_custom_call.1} parent=1 // pred_region
      %325 = vsyncadd [#allocation4], 0
      %s327 = sshll.u32 [#allocation7], 4
      %s328 = int_to_ptr.vmem [resolvable:$true] %s327
      %s329 = sshll.u32 %s2, 4
      %s330 = int_to_ptr.hbm [resolvable:$true] %s329
      %332 = dma.vmem_to_hbm [thread:$0]  %s328, 128, %s330, [#allocation4]
    $region21: #{tpu_custom_call.1} parent=1 // pred_fallthru
      _
    // Predicated region
    $region22: #{tpu_custom_call.1} parent=1 // pred_check
      _
    $region23: #{tpu_custom_call.1} parent=1 // pred_check_branch
      %334 = sbr.rel (0) target = $region25
    $region24: #{tpu_custom_call.1} parent=1 // pred_region
      %336 = dma.done [#allocation4], 128
    $region25: #{tpu_custom_call.1} parent=1 // pred_fallthru
      _
    %337 = vsyncpa [#allocation3], 1
    %338 = vsyncpa [#allocation6], 1
    %339 = vsyncpa [#allocation4], 1

</llo_original>
